<compile_context>
chip_gen: v7x
topology: tpu7x:2x2x1
jax: 0.10.0
libtpu: 0.0.40
codegen_flags: <defaults>
</compile_context>

<pallas_src>
import functools
import math

import jax
import jax.numpy as jnp
from jax import lax
from jax.experimental import pallas as pl
from jax.experimental.pallas import tpu as pltpu


def _round_up(a: int, b: int) -> int:
    return (a + b - 1) // b * b


def _vmem_limit_bytes() -> int:
    # Generation-aware scoped-VMEM budget: ~85% of physical per-core VMEM,
    # clamped to a safe range (v7x: 64 MiB physical, v5e/v6e: 128 MiB).
    try:
        cap = pltpu.get_tpu_info().vmem_capacity_bytes
    except Exception:
        cap = 64 * 1024 * 1024
    limit = int(cap * 0.85)
    return max(32 * 1024 * 1024, min(limit, 110 * 1024 * 1024))


# --------------------------------------------------------------------------
# Kernel 1: fused, K-tiled QKV projection.
#   x block:  (tq, tk)          w block: (tk, 3*dp)
#   outputs:  q/k/v blocks (tq, dp), written once at the last K step.
# --------------------------------------------------------------------------
def _qkv_proj_kernel(x_ref, w_ref, q_ref, k_ref, v_ref, acc_ref, *, dp):
    ki = pl.program_id(2)

    @pl.when(ki == 0)
    def _():
        acc_ref[...] = jnp.zeros_like(acc_ref)

    acc_ref[...] += jnp.dot(x_ref[...], w_ref[...],
                            preferred_element_type=jnp.float32)

    @pl.when(ki == pl.num_programs(2) - 1)
    def _():
        acc = acc_ref[...]
        # dp is a multiple of 128 -> lane-aligned, free views.
        q_ref[...] = acc[:, :dp].astype(q_ref.dtype)
        k_ref[...] = acc[:, dp:2 * dp].astype(k_ref.dtype)
        v_ref[...] = acc[:, 2 * dp:].astype(v_ref.dtype)


# --------------------------------------------------------------------------
# Kernel 2: flash-style attention, grid (B, H, q-tile, kv-tile).
# Only a (tq, tkv) score tile is resident; m/l/acc carry the online softmax.
# --------------------------------------------------------------------------
def _flash_attn_kernel(q_ref, k_ref, v_ref, o_ref, m_ref, l_ref, acc_ref, *,
                       seq_len, tkv, mask_keys):
    ki = pl.program_id(3)

    @pl.when(ki == 0)
    def _():
        m_ref[...] = jnp.full_like(m_ref, -jnp.inf)
        l_ref[...] = jnp.zeros_like(l_ref)
        acc_ref[...] = jnp.zeros_like(acc_ref)

    q = q_ref[...]                                  # (tq,  hdp)  (pre-scaled)
    k = k_ref[...]                                  # (tkv, hdp)
    v = v_ref[...]                                  # (tkv, hdp)

    # q @ k^T via contracting dims -- no explicit transpose of k.
    s = lax.dot_general(q, k, (((1,), (1,)), ((), ())),
                        preferred_element_type=jnp.float32)       # (tq, tkv)

    if mask_keys:  # static flag: only traced when the sequence was padded
        col = ki * tkv + lax.broadcasted_iota(jnp.int32, s.shape, 1)
        s = jnp.where(col < seq_len, s, -1e30)

    m_prev = m_ref[...]
    m_new = jnp.maximum(m_prev, jnp.max(s, axis=-1, keepdims=True))
    alpha = jnp.exp(m_prev - m_new)
    p = jnp.exp(s - m_new)

    l_ref[...] = alpha * l_ref[...] + jnp.sum(p, axis=-1, keepdims=True)
    acc_ref[...] = alpha * acc_ref[...] + jnp.dot(
        p.astype(v.dtype), v, preferred_element_type=jnp.float32)
    m_ref[...] = m_new

    @pl.when(ki == pl.num_programs(3) - 1)
    def _():
        inv = pl.reciprocal(l_ref[...], approx=True)
        o_ref[...] = (acc_ref[...] * inv).astype(o_ref.dtype)


def multihead_self_attention(x, wq, wk, wv, *, scale=True):
    """x: (B, S, D); wq/wk/wv: (H, hd, D) with D = H * hd. Returns (B, S, D)."""
    B, S, D = x.shape
    H, hd, D2 = wq.shape
    assert D == D2 and H * hd == D

    sdpa_scale = (1.0 / math.sqrt(hd)) if scale else 1.0

    # Pad head_dim to a multiple of 128 so every per-head block is a
    # lane-aligned, lane-dense view (no XLU relayouts, unmasked stores).
    hdp = _round_up(hd, 128)
    dp = H * hdp

    # Sequence tiling (pad + in-kernel key masking if S is not tile-aligned).
    tile = min(128, _round_up(S, 8))
    s_pad = _round_up(S, tile)
    tq = tkv = tile
    mask_keys = s_pad != S

    # K-tile the projection over D for large models (keeps weight blocks small).
    if D % 128 == 0 and D > 512:
        tk = 512
        while D % tk != 0:
            tk -= 128
    else:
        tk = D

    vmem_limit = _vmem_limit_bytes()

    # Fuse + pre-transpose all per-head weights once in the wrapper:
    #   (H, hd, D) -> (D, H*hdp) with per-head zero padding to hdp lanes.
    def _fuse(w, col_scale=None):
        wt = jnp.transpose(w, (2, 0, 1))                      # (D, H, hd)
        if col_scale is not None:
            wt = wt * jnp.asarray(col_scale, wt.dtype)
        if hdp != hd:
            wt = jnp.pad(wt, ((0, 0), (0, 0), (0, hdp - hd)))
        return wt.reshape(D, dp)

    # Softmax scale is folded into the Q weight columns.
    w_fused = jnp.concatenate(
        [_fuse(wq, sdpa_scale), _fuse(wk), _fuse(wv)], axis=-1)   # (D, 3*dp)

    x_p = x if s_pad == S else jnp.pad(x, ((0, 0), (0, s_pad - S), (0, 0)))

    # ---- pallas_call 1: QKV projection -----------------------------------
    proj_kernel = functools.partial(_qkv_proj_kernel, dp=dp)
    qkv_shape = jax.ShapeDtypeStruct((B, s_pad, dp), x.dtype)
    q, k, v = pl.pallas_call(
        proj_kernel,
        out_shape=(qkv_shape, qkv_shape, qkv_shape),
        grid_spec=pltpu.PrefetchScalarGridSpec(
            num_scalar_prefetch=0,
            grid=(B, s_pad // tq, D // tk),
            in_specs=[
                pl.BlockSpec((pl.Squeezed(), tq, tk),
                             lambda b, si, ki: (b, si, ki)),
                pl.BlockSpec((tk, 3 * dp), lambda b, si, ki: (ki, 0)),
            ],
            out_specs=(
                pl.BlockSpec((pl.Squeezed(), tq, dp),
                             lambda b, si, ki: (b, si, 0)),
                pl.BlockSpec((pl.Squeezed(), tq, dp),
                             lambda b, si, ki: (b, si, 0)),
                pl.BlockSpec((pl.Squeezed(), tq, dp),
                             lambda b, si, ki: (b, si, 0)),
            ),
            scratch_shapes=[pltpu.VMEM((tq, 3 * dp), jnp.float32)],
        ),
        compiler_params=pltpu.CompilerParams(
            dimension_semantics=("parallel", "parallel", "arbitrary"),
            vmem_limit_bytes=vmem_limit,
        ),
    )(x_p, w_fused)

    # ---- pallas_call 2: flash attention -----------------------------------
    attn_kernel = functools.partial(_flash_attn_kernel, seq_len=S, tkv=tkv,
                                    mask_keys=mask_keys)
    out_p = pl.pallas_call(
        attn_kernel,
        out_shape=jax.ShapeDtypeStruct((B, s_pad, dp), x.dtype),
        grid_spec=pltpu.PrefetchScalarGridSpec(
            num_scalar_prefetch=0,
            grid=(B, H, s_pad // tq, s_pad // tkv),
            in_specs=[
                pl.BlockSpec((pl.Squeezed(), tq, hdp),
                             lambda b, h, qi, ki: (b, qi, h)),
                pl.BlockSpec((pl.Squeezed(), tkv, hdp),
                             lambda b, h, qi, ki: (b, ki, h)),
                pl.BlockSpec((pl.Squeezed(), tkv, hdp),
                             lambda b, h, qi, ki: (b, ki, h)),
            ],
            out_specs=pl.BlockSpec((pl.Squeezed(), tq, hdp),
                                   lambda b, h, qi, ki: (b, qi, h)),
            scratch_shapes=[
                pltpu.VMEM((tq, 1), jnp.float32),     # running max m
                pltpu.VMEM((tq, 1), jnp.float32),     # running sum l
                pltpu.VMEM((tq, hdp), jnp.float32),   # output accumulator
            ],
        ),
        compiler_params=pltpu.CompilerParams(
            dimension_semantics=("parallel", "parallel", "parallel",
                                 "arbitrary"),
            vmem_limit_bytes=vmem_limit,
        ),
    )(q, k, v)

    # Drop sequence / per-head lane padding (no-op when hd % 128 == 0 and S
    # is tile-aligned).
    out = out_p
    if s_pad != S:
        out = out[:, :S]
    if hdp != hd:
        out = out.reshape(B, S, H, hdp)[..., :hd].reshape(B, S, D)
    return out


def _reference(x, wq, wk, wv, *, scale=True):
    """Pure-JAX reference matching the PyTorch forward."""
    H, hd, D = wq.shape
    sc = (1.0 / math.sqrt(hd)) if scale else 1.0
    outs = []
    for h in range(H):
        q = x @ wq[h].T
        k = x @ wk[h].T
        v = x @ wv[h].T
        s = (q @ jnp.swapaxes(k, -1, -2)) * sc
        p = jax.nn.softmax(s, axis=-1)
        outs.append(p @ v)
    return jnp.concatenate(outs, axis=-1)


if __name__ == "__main__":
    B, S, embed_dim, num_heads = 2, 8, 32, 4
    head_dim = embed_dim // num_heads

    key = jax.random.PRNGKey(0)
    kx, kq, kk, kv = jax.random.split(key, 4)
    x = jax.random.normal(kx, (B, S, embed_dim), dtype=jnp.float32)
    # Deterministic "Linear" weights, stacked per head: (H, head_dim, embed_dim)
    bound = 1.0 / math.sqrt(embed_dim)
    wq = jax.random.uniform(kq, (num_heads, head_dim, embed_dim),
                            minval=-bound, maxval=bound, dtype=jnp.float32)
    wk = jax.random.uniform(kk, (num_heads, head_dim, embed_dim),
                            minval=-bound, maxval=bound, dtype=jnp.float32)
    wv = jax.random.uniform(kv, (num_heads, head_dim, embed_dim),
                            minval=-bound, maxval=bound, dtype=jnp.float32)

    out = multihead_self_attention(x, wq, wk, wv, scale=True)
    out = jax.block_until_ready(out)

    ref = _reference(x, wq, wk, wv, scale=True)
    assert out.shape == (B, S, embed_dim)
    # Slightly loosened tolerance: approx (EUP) reciprocal in the softmax denom.
    assert jnp.allclose(out, ref, atol=5e-3, rtol=5e-3), \
        f"max abs err {jnp.max(jnp.abs(out - ref))}"

    print("KERNEL_OK")
</pallas_src>

<mosaic_0001>
module attributes {stable_mosaic.version = 11 : i64} {
  func.func @_qkv_proj_kernel(%arg0: i32, %arg1: i32, %arg2: i32, %arg3: memref<1x8x32xf32, #tpu.memory_space<vmem>>, %arg4: memref<32x1536xf32, #tpu.memory_space<vmem>>, %arg5: memref<1x8x512xf32, #tpu.memory_space<vmem>>, %arg6: memref<1x8x512xf32, #tpu.memory_space<vmem>>, %arg7: memref<1x8x512xf32, #tpu.memory_space<vmem>>, %arg8: memref<8x1536xf32, #tpu.memory_space<vmem>>) attributes {dimension_semantics = [#tpu.dimension_semantics<parallel>, #tpu.dimension_semantics<parallel>, #tpu.dimension_semantics<arbitrary>], iteration_bounds = array<i64: 2, 1, 1>, scalar_prefetch = 0 : i64, scratch_operands = 1 : i64, tpu.core_type = #tpu.core_type<tc>, window_params = [{transform_indices = @transform_0, window_bounds = array<i64: 1, 8, 32>}, {transform_indices = @transform_1, window_bounds = array<i64: 32, 1536>}, {transform_indices = @transform_2, window_bounds = array<i64: 1, 8, 512>}, {transform_indices = @transform_3, window_bounds = array<i64: 1, 8, 512>}, {transform_indices = @transform_4, window_bounds = array<i64: 1, 8, 512>}]} {
    %c0_i32 = arith.constant 0 : i32
    %0 = arith.cmpi eq, %arg2, %c0_i32 : i32
    %1 = arith.extui %0 : i1 to i32
    %c0_i32_0 = arith.constant 0 : i32
    %2 = arith.cmpi ne, %1, %c0_i32_0 : i32
    scf.if %2 {
      %cst_11 = arith.constant 0.000000e+00 : f32
      %13 = vector.broadcast %cst_11 : f32 to vector<8x1536xf32>
      %c0_12 = arith.constant 0 : index
      %c0_13 = arith.constant 0 : index
      %14 = vector.load %arg8[%c0_12, %c0_13] : memref<8x1536xf32, #tpu.memory_space<vmem>>, vector<8x1536xf32>
      tpu.vector_store %arg8[%c0_12, %c0_13], %13 {strides = array<i32>} : memref<8x1536xf32, #tpu.memory_space<vmem>>, vector<8x1536xf32>,
    } else {
    }
    %c0 = arith.constant 0 : index
    %c0_1 = arith.constant 0 : index
    %3 = vector.load %arg8[%c0, %c0_1] : memref<8x1536xf32, #tpu.memory_space<vmem>>, vector<8x1536xf32>
    %c0_2 = arith.constant 0 : index
    %c0_3 = arith.constant 0 : index
    %c0_4 = arith.constant 0 : index
    %4 = vector.load %arg3[%c0_2, %c0_3, %c0_4] : memref<1x8x32xf32, #tpu.memory_space<vmem>>, vector<1x8x32xf32>
    %5 = vector.shape_cast %4 : vector<1x8x32xf32> to vector<8x32xf32>
    %c0_5 = arith.constant 0 : index
    %c0_6 = arith.constant 0 : index
    %6 = vector.load %arg4[%c0_5, %c0_6] : memref<32x1536xf32, #tpu.memory_space<vmem>>, vector<32x1536xf32>
    %cst = arith.constant dense<0.000000e+00> : vector<8x1536xf32>
    %7 = tpu.matmul %5, %6, %cst {dimension_numbers = #tpu.dot_dimension_numbers<[1], [0], [0], [1], [0, 0, 1, 1], [], []>} : vector<8x32xf32>, vector<32x1536xf32>, vector<8x1536xf32> -> vector<8x1536xf32>
    %8 = arith.addf %3, %7 : vector<8x1536xf32>
    %c0_7 = arith.constant 0 : index
    %c0_8 = arith.constant 0 : index
    %9 = vector.load %arg8[%c0_7, %c0_8] : memref<8x1536xf32, #tpu.memory_space<vmem>>, vector<8x1536xf32>
    tpu.vector_store %arg8[%c0_7, %c0_8], %8 {strides = array<i32>} : memref<8x1536xf32, #tpu.memory_space<vmem>>, vector<8x1536xf32>,
    %c0_i32_9 = arith.constant 0 : i32
    %10 = arith.cmpi eq, %arg2, %c0_i32_9 : i32
    %11 = arith.extui %10 : i1 to i32
    %c0_i32_10 = arith.constant 0 : i32
    %12 = arith.cmpi ne, %11, %c0_i32_10 : i32
    scf.if %12 {
      %c0_11 = arith.constant 0 : index
      %c0_12 = arith.constant 0 : index
      %13 = vector.load %arg8[%c0_11, %c0_12] : memref<8x1536xf32, #tpu.memory_space<vmem>>, vector<8x1536xf32>
      %14 = vector.extract_strided_slice %13 {offsets = [0, 0], sizes = [8, 512], strides = [1, 1]} : vector<8x1536xf32> to vector<8x512xf32>
      %c0_13 = arith.constant 0 : index
      %c0_14 = arith.constant 0 : index
      %c0_15 = arith.constant 0 : index
      %15 = vector.load %arg5[%c0_13, %c0_14, %c0_15] : memref<1x8x512xf32, #tpu.memory_space<vmem>>, vector<1x8x512xf32>
      %16 = vector.shape_cast %15 : vector<1x8x512xf32> to vector<8x512xf32>
      %17 = vector.shape_cast %14 : vector<8x512xf32> to vector<1x8x512xf32>
      tpu.vector_store %arg5[%c0_13, %c0_14, %c0_15], %17 {strides = array<i32>} : memref<1x8x512xf32, #tpu.memory_space<vmem>>, vector<1x8x512xf32>,
      %18 = vector.extract_strided_slice %13 {offsets = [0, 512], sizes = [8, 512], strides = [1, 1]} : vector<8x1536xf32> to vector<8x512xf32>
      %c0_16 = arith.constant 0 : index
      %c0_17 = arith.constant 0 : index
      %c0_18 = arith.constant 0 : index
      %19 = vector.load %arg6[%c0_16, %c0_17, %c0_18] : memref<1x8x512xf32, #tpu.memory_space<vmem>>, vector<1x8x512xf32>
      %20 = vector.shape_cast %19 : vector<1x8x512xf32> to vector<8x512xf32>
      %21 = vector.shape_cast %18 : vector<8x512xf32> to vector<1x8x512xf32>
      tpu.vector_store %arg6[%c0_16, %c0_17, %c0_18], %21 {strides = array<i32>} : memref<1x8x512xf32, #tpu.memory_space<vmem>>, vector<1x8x512xf32>,
      %22 = vector.extract_strided_slice %13 {offsets = [0, 1024], sizes = [8, 512], strides = [1, 1]} : vector<8x1536xf32> to vector<8x512xf32>
      %c0_19 = arith.constant 0 : index
      %c0_20 = arith.constant 0 : index
      %c0_21 = arith.constant 0 : index
      %23 = vector.load %arg7[%c0_19, %c0_20, %c0_21] : memref<1x8x512xf32, #tpu.memory_space<vmem>>, vector<1x8x512xf32>
      %24 = vector.shape_cast %23 : vector<1x8x512xf32> to vector<8x512xf32>
      %25 = vector.shape_cast %22 : vector<8x512xf32> to vector<1x8x512xf32>
      tpu.vector_store %arg7[%c0_19, %c0_20, %c0_21], %25 {strides = array<i32>} : memref<1x8x512xf32, #tpu.memory_space<vmem>>, vector<1x8x512xf32>,
    } else {
    }
    return
  }
  func.func @transform_0(%arg0: i32, %arg1: i32, %arg2: i32) -> (i32, i32, i32) {
    %c0_i32 = arith.constant 0 : i32
    return %arg0, %arg1, %arg2 : i32, i32, i32
  }
  func.func @transform_1(%arg0: i32, %arg1: i32, %arg2: i32) -> (i32, i32) {
    %c0_i32 = arith.constant 0 : i32
    %c0_i32_0 = arith.constant 0 : i32
    return %arg2, %c0_i32 : i32, i32
  }
  func.func @transform_2(%arg0: i32, %arg1: i32, %arg2: i32) -> (i32, i32, i32) {
    %c0_i32 = arith.constant 0 : i32
    %c0_i32_0 = arith.constant 0 : i32
    return %arg0, %arg1, %c0_i32 : i32, i32, i32
  }
  func.func @transform_3(%arg0: i32, %arg1: i32, %arg2: i32) -> (i32, i32, i32) {
    %c0_i32 = arith.constant 0 : i32
    %c0_i32_0 = arith.constant 0 : i32
    return %arg0, %arg1, %c0_i32 : i32, i32, i32
  }
  func.func @transform_4(%arg0: i32, %arg1: i32, %arg2: i32) -> (i32, i32, i32) {
    %c0_i32 = arith.constant 0 : i32
    %c0_i32_0 = arith.constant 0 : i32
    return %arg0, %arg1, %c0_i32 : i32, i32, i32
  }
}

</mosaic_0001>

<llo_original>
// kernel: tpu_custom_call.1
$region0: #{tpu_custom_call.1}
  #allocation0 [shape = 'u32[]', space=smem, size = 0x4, offset = 0x4, fixed_abs, tag = 'smem constant byte address 0x4 - core index']
  #allocation1 [shape = 'u32[144,128]{1,0:T(1,128)}', space=vmem, size = 0x12000, scoped, tag = 'internal scratch']
  #allocation2 [shape = 'f32[8,1536]{1,0:T(8,128)}', space=vmem, size = 0xc000, scoped, tag = 'scratch operand']
  %s0 = inlined_call_operand.hbm [shape: f32[2,8,32], index: 0, kind: input, shape index: {}]
  %s1 = inlined_call_operand.hbm [shape: f32[32,1536], index: 1, kind: input, shape index: {}]
  %s2 = inlined_call_operand.hbm [shape: f32[2,8,512], index: 2, kind: output, shape index: {0}]
  %s3 = inlined_call_operand.hbm [shape: f32[2,8,512], index: 3, kind: output, shape index: {1}]
  %s4 = inlined_call_operand.hbm [shape: f32[2,8,512], index: 4, kind: output, shape index: {2}]
  %5 = xla_tuple %s2, %s3, %s4
  %s6 = sld [smem:[#allocation0]]
  $region73: #{tpu_custom_call.1} parent=0
    _
  %s8 = ssub.s32 1, %s6
  %s9 = scalar_select 0, %s8, %s6
  $region1: #{tpu_custom_call.1} parent=0
    #allocation3 [shape = 'u8[8192]{0}', space=vmem, size = 0x2000, scoped, tag = 'input window, operand 0']
    #allocation4 [shape = 's32[2]{0}', space=sflag, size = 0x8, scoped, tag = 'scoped memory for tpu_custom_call.1']
    #allocation5 [shape = 's32[2]{0}', space=sflag, size = 0x8, scoped, tag = 'scoped memory for tpu_custom_call.1']
    #allocation6 [shape = 'u8[196608]{0}', space=vmem, size = 0x30000, scoped, tag = 'input window, operand 1, single buffered']
    #allocation7 [shape = 's32[1]{0}', space=sflag, size = 0x4, scoped, tag = 'scoped memory for tpu_custom_call.1']
    #allocation8 [shape = 'u8[32768]{0}', space=vmem, size = 0x8000, scoped, tag = 'output window, operand 0']
    #allocation9 [shape = 'u8[32768]{0}', space=vmem, size = 0x8000, scoped, tag = 'output window, operand 1']
    #allocation10 [shape = 's32[2]{0}', space=sflag, size = 0x8, scoped, tag = 'scoped memory for tpu_custom_call.1']
    #allocation11 [shape = 'u8[32768]{0}', space=vmem, size = 0x8000, scoped, tag = 'output window, operand 2']
    %10 = vsyncpa [#allocation4], 0
    %s11 = scalar_lea.sflag [#allocation4], 1
    %12 = vsyncpa %s11, 0
    %13 = vsyncpa [#allocation7], 0
    %14 = vsyncpa [#allocation5], 0
    %s15 = scalar_lea.sflag [#allocation5], 1
    %16 = vsyncpa %s15, 0
    %17 = vsyncpa [#allocation10], 0
    %s18 = scalar_lea.sflag [#allocation10], 1
    %19 = vsyncpa %s18, 0
    loop: start=0, step=1, limit=4
    $region2: #{tpu_custom_call.1} parent=1 // loop_pre_header
      _
    $region3: #{tpu_custom_call.1} parent=1 // loop_header
      %s21 = sphi 0, %s25
      %p22 = scmp.ge.s32.totalorder %s21, 4
      %s28 = sphi 0, %s47
      %s29 = sphi 0, %s43
      %s30 = sphi 0, %s39
      %s31 = sphi 0, %s28
      %s32 = sphi 0, %s29
      %s33 = sphi 0, %s30
      %s34 = sphi 0, %s31
      %s35 = sphi 0, %s32
      %s36 = sphi 0, %s33
      %s54 = sphi 0, %s56
      %s57 = sphi 0, %s54
      %s58 = sphi 0, %s57
      %s74 = sphi 0, %s58
      %s80 = sphi 0, %s82
      %s83 = sphi 0, %s80
      %s84 = sphi 0, %s83
      %s100 = sphi 0, %s84
      %s108 = sphi 0, %s110
      %s111 = sphi 0, %s108
      %s112 = sphi 0, %s111
      %s128 = sphi 0, %s112
      %s136 = sphi 0, %s138
      %s139 = sphi 0, %s136
      %s140 = sphi 0, %s139
      %s156 = sphi 0, %s140
      %s164 = sphi 0, %s166
      %s167 = sphi 0, %s164
      %s168 = sphi 0, %s167
      %s184 = sphi 0, %s168
    $region4: #{tpu_custom_call.1} parent=1 // loop_header_branch
      %24 = sbr.rel (%p22) target = $region8
    $region5: #{tpu_custom_call.1} parent=1 // loop_body
      %s26 = ssub.s32 %s21, 1
      %s27 = ssub.s32 %s21, 2
      %s37 = sadd.s32 1, %s30
      %p38 = scmp.ge.s32.totalorder %s37, 1
      %s39 = scalar_select %p38, 0, %s37
      %s40 = sadd.s32 1, %s29
      %s41 = scalar_select %p38, %s40, %s29
      %p42 = scmp.ge.s32.totalorder %s41, 1
      %s43 = scalar_select %p42, 0, %s41
      %s44 = sadd.s32 1, %s28
      %s45 = scalar_select %p42, %s44, %s28
      %p46 = scmp.ge.s32.totalorder %s45, 2
      %s47 = scalar_select %p46, 0, %s45
      %s48 = ssub.s32 %s28, %s47
      %s49 = ssub.s32 %s29, %s43
      %s50 = sor.u32 %s48, %s49
      %s51 = ssub.s32 %s30, %s39
      %s52 = sor.u32 %s50, %s51
      %p53 = scmp.eq.s32.totalorder %s52, 0
      %s55 = sadd.s32 %s54, 1
      %s56 = scalar_select %p53, %s54, %s55
      %p59 = pneg %p53
      %p60 = scmp.eq.s32.totalorder %s21, 1
      %p61 = por %p59, %p60
      %p62 = scmp.ne.s32.totalorder %s54, %s57
      %p63 = scmp.eq.s32.totalorder %s21, 0
      %p64 = por %p62, %p63
      %p65 = scmp.ne.s32.totalorder %s54, %s57
      %p66 = scmp.eq.s32.totalorder %s26, 1
      %p67 = por %p65, %p66
      %p68 = scmp.ne.s32.totalorder %s57, %s58
      %p69 = scmp.eq.s32.totalorder %s26, 0
      %p70 = por %p68, %p69
      %p71 = scmp.ne.s32.totalorder %s57, %s58
      %p72 = scmp.eq.s32.totalorder %s27, 1
      %p73 = por %p71, %p72
      %p75 = scmp.ne.s32.totalorder %s58, %s74
      %p76 = scmp.eq.s32.totalorder %s27, 0
      %p77 = por %p75, %p76
      %s78 = ssub.s32 %s30, %s39
      %p79 = scmp.eq.s32.totalorder %s78, 0
      %s81 = sadd.s32 %s80, 1
      %s82 = scalar_select %p79, %s80, %s81
      %p85 = pneg %p79
      %p86 = scmp.eq.s32.totalorder %s21, 1
      %p87 = por %p85, %p86
      %p88 = scmp.ne.s32.totalorder %s80, %s83
      %p89 = scmp.eq.s32.totalorder %s21, 0
      %p90 = por %p88, %p89
      %p91 = scmp.ne.s32.totalorder %s80, %s83
      %p92 = scmp.eq.s32.totalorder %s26, 1
      %p93 = por %p91, %p92
      %p94 = scmp.ne.s32.totalorder %s83, %s84
      %p95 = scmp.eq.s32.totalorder %s26, 0
      %p96 = por %p94, %p95
      %p97 = scmp.ne.s32.totalorder %s83, %s84
      %p98 = scmp.eq.s32.totalorder %s27, 1
      %p99 = por %p97, %p98
      %p101 = scmp.ne.s32.totalorder %s84, %s100
      %p102 = scmp.eq.s32.totalorder %s27, 0
      %p103 = por %p101, %p102
      %s104 = ssub.s32 %s28, %s47
      %s105 = ssub.s32 %s29, %s43
      %s106 = sor.u32 %s104, %s105
      %p107 = scmp.eq.s32.totalorder %s106, 0
      %s109 = sadd.s32 %s108, 1
      %s110 = scalar_select %p107, %s108, %s109
      %p113 = pneg %p107
      %p114 = scmp.eq.s32.totalorder %s21, 1
      %p115 = por %p113, %p114
      %p116 = scmp.ne.s32.totalorder %s108, %s111
      %p117 = scmp.eq.s32.totalorder %s21, 0
      %p118 = por %p116, %p117
      %p119 = scmp.ne.s32.totalorder %s108, %s111
      %p120 = scmp.eq.s32.totalorder %s26, 1
      %p121 = por %p119, %p120
      %p122 = scmp.ne.s32.totalorder %s111, %s112
      %p123 = scmp.eq.s32.totalorder %s26, 0
      %p124 = por %p122, %p123
      %p125 = scmp.ne.s32.totalorder %s111, %s112
      %p126 = scmp.eq.s32.totalorder %s27, 1
      %p127 = por %p125, %p126
      %p129 = scmp.ne.s32.totalorder %s112, %s128
      %p130 = scmp.eq.s32.totalorder %s27, 0
      %p131 = por %p129, %p130
      %s132 = ssub.s32 %s28, %s47
      %s133 = ssub.s32 %s29, %s43
      %s134 = sor.u32 %s132, %s133
      %p135 = scmp.eq.s32.totalorder %s134, 0
      %s137 = sadd.s32 %s136, 1
      %s138 = scalar_select %p135, %s136, %s137
      %p141 = pneg %p135
      %p142 = scmp.eq.s32.totalorder %s21, 1
      %p143 = por %p141, %p142
      %p144 = scmp.ne.s32.totalorder %s136, %s139
      %p145 = scmp.eq.s32.totalorder %s21, 0
      %p146 = por %p144, %p145
      %p147 = scmp.ne.s32.totalorder %s136, %s139
      %p148 = scmp.eq.s32.totalorder %s26, 1
      %p149 = por %p147, %p148
      %p150 = scmp.ne.s32.totalorder %s139, %s140
      %p151 = scmp.eq.s32.totalorder %s26, 0
      %p152 = por %p150, %p151
      %p153 = scmp.ne.s32.totalorder %s139, %s140
      %p154 = scmp.eq.s32.totalorder %s27, 1
      %p155 = por %p153, %p154
      %p157 = scmp.ne.s32.totalorder %s140, %s156
      %p158 = scmp.eq.s32.totalorder %s27, 0
      %p159 = por %p157, %p158
      %s160 = ssub.s32 %s28, %s47
      %s161 = ssub.s32 %s29, %s43
      %s162 = sor.u32 %s160, %s161
      %p163 = scmp.eq.s32.totalorder %s162, 0
      %s165 = sadd.s32 %s164, 1
      %s166 = scalar_select %p163, %s164, %s165
      %p169 = pneg %p163
      %p170 = scmp.eq.s32.totalorder %s21, 1
      %p171 = por %p169, %p170
      %p172 = scmp.ne.s32.totalorder %s164, %s167
      %p173 = scmp.eq.s32.totalorder %s21, 0
      %p174 = por %p172, %p173
      %p175 = scmp.ne.s32.totalorder %s164, %s167
      %p176 = scmp.eq.s32.totalorder %s26, 1
      %p177 = por %p175, %p176
      %p178 = scmp.ne.s32.totalorder %s167, %s168
      %p179 = scmp.eq.s32.totalorder %s26, 0
      %p180 = por %p178, %p179
      %p181 = scmp.ne.s32.totalorder %s167, %s168
      %p182 = scmp.eq.s32.totalorder %s27, 1
      %p183 = por %p181, %p182
      %p185 = scmp.ne.s32.totalorder %s168, %s184
      %p186 = scmp.eq.s32.totalorder %s27, 0
      %p187 = por %p185, %p186
      %p188 = scmp.le.s32.totalorder 1, %s21
      %p189 = scmp.lt.s32.totalorder %s21, 3
      %p190 = pnand %p188, %p189
      %p191 = pneg %p190
      // Predicated region
      $region9: #{tpu_custom_call.1} parent=5 // pred_check
        _
      $region10: #{tpu_custom_call.1} parent=5 // pred_check_branch
        %193 = sbr.rel (%p190) target = $region12
      $region11: #{tpu_custom_call.1} parent=5 // pred_region
        %s194 = ssub.s32 %s21, 1
        // Predicated region
        $region13: #{tpu_custom_call.1} parent=11 // pred_check
          %p195 = pneg %p96
        $region14: #{tpu_custom_call.1} parent=11 // pred_check_branch
          %197 = sbr.rel (%p195) target = $region16
        $region15: #{tpu_custom_call.1} parent=11 // pred_region
          %s198 = smul.u32 4, %s33
          %s200 = ssub.s32 6144, 6144
          %201 = vsyncadd [#allocation7], %s200
          %s202 = smul.addr %s198, 12
          %s203 = smul.addr %s202, 128
          %s204 = scalar_lea.hbm %s1, %s203
          %s205 = sshll.u32 [#allocation6], 4
          %s206 = int_to_ptr.vmem [resolvable:$true] %s205
          %211 = dma.hbm_to_vmem [thread:$0]  %s204, 6144, %s206, [#allocation7], 1536, 1536, 96
        $region16: #{tpu_custom_call.1} parent=11 // pred_fallthru
          _
      $region12: #{tpu_custom_call.1} parent=5 // pred_fallthru
        _
      %p212 = scmp.lt.s32.totalorder %s21, 2
      // Predicated region
      $region17: #{tpu_custom_call.1} parent=5 // pred_check
        %p213 = pneg %p212
      $region18: #{tpu_custom_call.1} parent=5 // pred_check_branch
        %215 = sbr.rel (%p213) target = $region20
      $region19: #{tpu_custom_call.1} parent=5 // pred_region
        // Predicated region
        $region21: #{tpu_custom_call.1} parent=19 // pred_check
          %p216 = pneg %p64
        $region22: #{tpu_custom_call.1} parent=19 // pred_check_branch
          %218 = sbr.rel (%p216) target = $region24
        $region23: #{tpu_custom_call.1} parent=19 // pred_region
          %s219 = sand.u32 %s54, 1
          %s220 = scalar_lea.sflag [#allocation4], %s219
          %s221 = sand.u32 %s54, 1
          %s222 = smul.addr %s221, 8
          %s223 = scalar_lea.vmem [#allocation3], %s222
          %s225 = ssub.s32 128, 128
          %226 = vsyncadd %s220, %s225
          %s227 = sadd.s32 %s30, %s29
          %s228 = sadd.s32 %s227, %s28
          %s229 = smul.addr %s228, 128
          %s230 = scalar_lea.hbm %s0, %s229
          %s232 = sshll.u32 %s223, 4
          %s233 = int_to_ptr.vmem [resolvable:$true] %s232
          %235 = dma.hbm_to_vmem [thread:$0]  %s230, 128, %s233, %s220
        $region24: #{tpu_custom_call.1} parent=19 // pred_fallthru
          _
      $region20: #{tpu_custom_call.1} parent=5 // pred_fallthru
        _
      %p236 = scmp.le.s32.totalorder 1, %s21
      %p237 = scmp.lt.s32.totalorder %s21, 3
      %p238 = pnand %p236, %p237
      %p239 = pneg %p238
      // Predicated region
      $region25: #{tpu_custom_call.1} parent=5 // pred_check
        _
      $region26: #{tpu_custom_call.1} parent=5 // pred_check_branch
        %241 = sbr.rel (%p238) target = $region28
      $region27: #{tpu_custom_call.1} parent=5 // pred_region
        %s242 = ssub.s32 %s21, 1
        %s243 = sand.u32 %s57, 1
        %s244 = scalar_lea.sflag [#allocation4], %s243
        %s245 = sand.u32 %s57, 1
        %s246 = smul.addr %s245, 8
        %s247 = scalar_lea.vmem [#allocation3], %s246
        // Predicated region
        $region29: #{tpu_custom_call.1} parent=27 // pred_check
          %p248 = pneg %p70
        $region30: #{tpu_custom_call.1} parent=27 // pred_check_branch
          %250 = sbr.rel (%p248) target = $region32
        $region31: #{tpu_custom_call.1} parent=27 // pred_region
          %251 = dma.done %s244, 128
        $region32: #{tpu_custom_call.1} parent=27 // pred_fallthru
          _
        // Predicated region
        $region33: #{tpu_custom_call.1} parent=27 // pred_check
          %p252 = pneg %p96
        $region34: #{tpu_custom_call.1} parent=27 // pred_check_branch
          %254 = sbr.rel (%p252) target = $region36
        $region35: #{tpu_custom_call.1} parent=27 // pred_region
          %255 = dma.done [#allocation7], 6144
        $region36: #{tpu_custom_call.1} parent=27 // pred_fallthru
          _
        %s256 = sand.u32 %s57, 1
        %s257 = scalar_lea.sflag [#allocation4], %s256
        %s258 = sand.u32 %s57, 1
        %s259 = smul.addr %s258, 8
        %s260 = scalar_lea.vmem [#allocation3], %s259
        %p261 = pneg %p70
        %p262 = pneg %p67
        %p263 = pneg %p96
        %p264 = pneg %p93
        %p265 = pneg %p124
        %p266 = pneg %p121
        %s267 = sand.u32 %s111, 1
        %s268 = scalar_lea.sflag [#allocation5], %s267
        %s269 = sand.u32 %s111, 1
        %s270 = smul.addr %s269, 32
        %s271 = scalar_lea.vmem [#allocation8], %s270
        %p272 = pneg %p152
        %p273 = pneg %p149
        %s274 = sand.u32 %s26, 1
        %s275 = scalar_lea.sflag [#allocation10], %s274
        %s276 = sand.u32 %s139, 1
        %s277 = smul.addr %s276, 32
        %s278 = scalar_lea.vmem [#allocation9], %s277
        %p279 = pneg %p180
        %p280 = pneg %p177
        %s281 = sand.u32 %s26, 1
        %s282 = scalar_lea.sflag [#allocation10], %s281
        %s283 = sand.u32 %s167, 1
        %s284 = smul.addr %s283, 32
        %s285 = scalar_lea.vmem [#allocation11], %s284
        %s286 = smul.u32 4, %s33
        %p287 = scmp.eq.s32.totalorder %s33, 0
        // Predicated region
        $region37: #{tpu_custom_call.1} parent=27 // pred_check
          %p288 = pneg %p287
        $region38: #{tpu_custom_call.1} parent=27 // pred_check_branch
          %290 = sbr.rel (%p288) target = $region40
        $region39: #{tpu_custom_call.1} parent=27 // pred_region
          %291 = vst [vmem:[#allocation2] sm:$0xff] 0.0
          %292 = vst [vmem:[#allocation2 + $0x8] sm:$0xff] 0.0
          %293 = vst [vmem:[#allocation2 + $0x10] sm:$0xff] 0.0
          %294 = vst [vmem:[#allocation2 + $0x18] sm:$0xff] 0.0
          %295 = vst [vmem:[#allocation2 + $0x20] sm:$0xff] 0.0
          %296 = vst [vmem:[#allocation2 + $0x28] sm:$0xff] 0.0
          %297 = vst [vmem:[#allocation2 + $0x30] sm:$0xff] 0.0
          %298 = vst [vmem:[#allocation2 + $0x38] sm:$0xff] 0.0
          %299 = vst [vmem:[#allocation2 + $0x40] sm:$0xff] 0.0
          %300 = vst [vmem:[#allocation2 + $0x48] sm:$0xff] 0.0
          %301 = vst [vmem:[#allocation2 + $0x50] sm:$0xff] 0.0
          %302 = vst [vmem:[#allocation2 + $0x58] sm:$0xff] 0.0
        $region40: #{tpu_custom_call.1} parent=27 // pred_fallthru
          _
        %v303 = vld [vmem:[#allocation2] sm:$0xff]
        %v304 = vld [vmem:[#allocation2 + $0x8] sm:$0xff]
        %v305 = vld [vmem:[#allocation2 + $0x10] sm:$0xff]
        %v306 = vld [vmem:[#allocation2 + $0x18] sm:$0xff]
        %v307 = vld [vmem:[#allocation2 + $0x20] sm:$0xff]
        %v308 = vld [vmem:[#allocation2 + $0x28] sm:$0xff]
        %v309 = vld [vmem:[#allocation2 + $0x30] sm:$0xff]
        %v310 = vld [vmem:[#allocation2 + $0x38] sm:$0xff]
        %v311 = vld [vmem:[#allocation2 + $0x40] sm:$0xff]
        %v312 = vld [vmem:[#allocation2 + $0x48] sm:$0xff]
        %v313 = vld [vmem:[#allocation2 + $0x50] sm:$0xff]
        %v314 = vld [vmem:[#allocation2 + $0x58] sm:$0xff]
        %v315 = vld [vmem:[%s247] sm:$0xff]
        %v316 = vld [vmem:[#allocation6] sm:$0xff]
        %v317 = vld [vmem:[#allocation6 + $0x8] sm:$0xff]
        %v318 = vld [vmem:[#allocation6 + $0x10] sm:$0xff]
        %v319 = vld [vmem:[#allocation6 + $0x18] sm:$0xff]
        %v320 = vld [vmem:[#allocation6 + $0x20] sm:$0xff]
        %v321 = vld [vmem:[#allocation6 + $0x28] sm:$0xff]
        %v322 = vld [vmem:[#allocation6 + $0x30] sm:$0xff]
        %v323 = vld [vmem:[#allocation6 + $0x38] sm:$0xff]
        %v324 = vld [vmem:[#allocation6 + $0x40] sm:$0xff]
        %v325 = vld [vmem:[#allocation6 + $0x48] sm:$0xff]
        %v326 = vld [vmem:[#allocation6 + $0x50] sm:$0xff]
        %v327 = vld [vmem:[#allocation6 + $0x58] sm:$0xff]
        %v328 = vld [vmem:[#allocation6 + $0x60] sm:$0xff]
        %v329 = vld [vmem:[#allocation6 + $0x68] sm:$0xff]
        %v330 = vld [vmem:[#allocation6 + $0x70] sm:$0xff]
        %v331 = vld [vmem:[#allocation6 + $0x78] sm:$0xff]
        %v332 = vld [vmem:[#allocation6 + $0x80] sm:$0xff]
        %v333 = vld [vmem:[#allocation6 + $0x88] sm:$0xff]
        %v334 = vld [vmem:[#allocation6 + $0x90] sm:$0xff]
        %v335 = vld [vmem:[#allocation6 + $0x98] sm:$0xff]
        %v336 = vld [vmem:[#allocation6 + $0xa0] sm:$0xff]
        %v337 = vld [vmem:[#allocation6 + $0xa8] sm:$0xff]
        %v338 = vld [vmem:[#allocation6 + $0xb0] sm:$0xff]
        %v339 = vld [vmem:[#allocation6 + $0xb8] sm:$0xff]
        %v340 = vld [vmem:[#allocation6 + $0xc0] sm:$0xff]
        %v341 = vld [vmem:[#allocation6 + $0xc8] sm:$0xff]
        %v342 = vld [vmem:[#allocation6 + $0xd0] sm:$0xff]
        %v343 = vld [vmem:[#allocation6 + $0xd8] sm:$0xff]
        %v344 = vld [vmem:[#allocation6 + $0xe0] sm:$0xff]
        %v345 = vld [vmem:[#allocation6 + $0xe8] sm:$0xff]
        %v346 = vld [vmem:[#allocation6 + $0xf0] sm:$0xff]
        %v347 = vld [vmem:[#allocation6 + $0xf8] sm:$0xff]
        %v348 = vld [vmem:[#allocation6 + $0x100] sm:$0xff]
        %v349 = vld [vmem:[#allocation6 + $0x108] sm:$0xff]
        %v350 = vld [vmem:[#allocation6 + $0x110] sm:$0xff]
        %v351 = vld [vmem:[#allocation6 + $0x118] sm:$0xff]
        %v352 = vld [vmem:[#allocation6 + $0x120] sm:$0xff]
        %v353 = vld [vmem:[#allocation6 + $0x128] sm:$0xff]
        %v354 = vld [vmem:[#allocation6 + $0x130] sm:$0xff]
        %v355 = vld [vmem:[#allocation6 + $0x138] sm:$0xff]
        %v356 = vld [vmem:[#allocation6 + $0x140] sm:$0xff]
        %v357 = vld [vmem:[#allocation6 + $0x148] sm:$0xff]
        %v358 = vld [vmem:[#allocation6 + $0x150] sm:$0xff]
        %v359 = vld [vmem:[#allocation6 + $0x158] sm:$0xff]
        %v360 = vld [vmem:[#allocation6 + $0x160] sm:$0xff]
        %v361 = vld [vmem:[#allocation6 + $0x168] sm:$0xff]
        %v362 = vld [vmem:[#allocation6 + $0x170] sm:$0xff]
        %v363 = vld [vmem:[#allocation6 + $0x178] sm:$0xff]
        %vm364 = vcmask 261120
        %v366 = vsel %vm364, %v315, 0
        %368 = vmatprep.subr.mxu0 %v317
        %369 = vmatpush1.msra.mxu0 %v316
        %370 = vmatprep.subr.mxu0 %v329
        %371 = vmatpush1.msra.mxu0 %v328
        %372 = vmatprep.subr.mxu0 %v341
        %373 = vmatpush1.msra.mxu0 %v340
        %374 = vmatprep.subr.mxu0 %v353
        %375 = vmatpush1.msra.mxu0 %v352
        %376 = vmatprep.subr.mxu0 0.0
        %377 = vmatpush1.msra.mxu0 0.0
        %378 = vmatprep.subr.mxu0 0.0
        %379 = vmatpush1.msra.mxu0 0.0
        %380 = vmatprep.subr.mxu0 0.0
        %381 = vmatpush1.msra.mxu0 0.0
        %382 = vmatprep.subr.mxu0 0.0
        %383 = vmatpush1.msra.mxu0 0.0
        %384 = vmatprep.subr.mxu0 0.0
        %385 = vmatpush1.msra.mxu0 0.0
        %386 = vmatprep.subr.mxu0 0.0
        %387 = vmatpush1.msra.mxu0 0.0
        %388 = vmatprep.subr.mxu0 0.0
        %389 = vmatpush1.msra.mxu0 0.0
        %390 = vmatprep.subr.mxu0 0.0
        %391 = vmatpush1.msra.mxu0 0.0
        %392 = vmatprep.subr.mxu0 0.0
        %393 = vmatpush1.msra.mxu0 0.0
        %394 = vmatprep.subr.mxu0 0.0
        %395 = vmatpush1.msra.mxu0 0.0
        %396 = vmatprep.subr.mxu0 0.0
        %397 = vmatpush1.msra.mxu0 0.0
        %398 = vmatprep.subr.mxu0 0.0
        %399 = vmatpush1.msra.mxu0 0.0
        %400 = vmatprep.subr.mxu0 0.0
        %401 = vmatpush1.msra.mxu0 0.0
        %402 = vmatprep.subr.mxu0 0.0
        %403 = vmatpush1.msra.mxu0 0.0
        %404 = vmatprep.subr.mxu0 0.0
        %405 = vmatpush1.msra.mxu0 0.0
        %406 = vmatprep.subr.mxu0 0.0
        %407 = vmatpush1.msra.mxu0 0.0
        %408 = vmatprep.subr.mxu0 0.0
        %409 = vmatpush1.msra.mxu0 0.0
        %410 = vmatprep.subr.mxu0 0.0
        %411 = vmatpush1.msra.mxu0 0.0
        %412 = vmatprep.subr.mxu0 0.0
        %413 = vmatpush1.msra.mxu0 0.0
        %414 = vmatprep.subr.mxu0 0.0
        %415 = vmatpush1.msra.mxu0 0.0
        %416 = vmatprep.subr.mxu0 0.0
        %417 = vmatpush1.msra.mxu0 0.0
        %418 = vmatprep.subr.mxu0 0.0
        %419 = vmatpush1.msra.mxu0 0.0
        %420 = vmatprep.subr.mxu0 0.0
        %421 = vmatpush1.msra.mxu0 0.0
        %422 = vmatprep.subr.mxu0 0.0
        %423 = vmatpush1.msra.mxu0 0.0
        %424 = vmatprep.subr.mxu0 0.0
        %425 = vmatpush1.msra.mxu0 0.0
        %426 = vmatprep.subr.mxu0 0.0
        %427 = vmatpush1.msra.mxu0 0.0
        %428 = vmatprep.subr.mxu0 0.0
        %429 = vmatpush1.msra.mxu0 0.0
        %430 = vmatprep.subr.mxu0 0.0
        %431 = vmatpush1.msra.mxu0 0.0
        %432 = vmatprep.mubr.f32.mxu0 0.0
        %433 = vmatmul.mubr.f32.gmra.mrb[0].mxu0 %v366
        %v434 = vpop.f32.mrb[0].mxu0
        %v435 = vadd.f32 0.0, %v434
        %v436 = vpop.f32.mrb[0].mxu0
        %v437 = vadd.f32 0.0, %v436
        %438 = vdwg.mxu0
        %439 = vmatprep.subr.mxu0 %v319
        %440 = vmatpush1.msra.mxu0 %v318
        %441 = vmatprep.subr.mxu0 %v331
        %442 = vmatpush1.msra.mxu0 %v330
        %443 = vmatprep.subr.mxu0 %v343
        %444 = vmatpush1.msra.mxu0 %v342
        %445 = vmatprep.subr.mxu0 %v355
        %446 = vmatpush1.msra.mxu0 %v354
        %447 = vmatprep.subr.mxu0 0.0
        %448 = vmatpush1.msra.mxu0 0.0
        %449 = vmatprep.subr.mxu0 0.0
        %450 = vmatpush1.msra.mxu0 0.0
        %451 = vmatprep.subr.mxu0 0.0
        %452 = vmatpush1.msra.mxu0 0.0
        %453 = vmatprep.subr.mxu0 0.0
        %454 = vmatpush1.msra.mxu0 0.0
        %455 = vmatprep.subr.mxu0 0.0
        %456 = vmatpush1.msra.mxu0 0.0
        %457 = vmatprep.subr.mxu0 0.0
        %458 = vmatpush1.msra.mxu0 0.0
        %459 = vmatprep.subr.mxu0 0.0
        %460 = vmatpush1.msra.mxu0 0.0
        %461 = vmatprep.subr.mxu0 0.0
        %462 = vmatpush1.msra.mxu0 0.0
        %463 = vmatprep.subr.mxu0 0.0
        %464 = vmatpush1.msra.mxu0 0.0
        %465 = vmatprep.subr.mxu0 0.0
        %466 = vmatpush1.msra.mxu0 0.0
        %467 = vmatprep.subr.mxu0 0.0
        %468 = vmatpush1.msra.mxu0 0.0
        %469 = vmatprep.subr.mxu0 0.0
        %470 = vmatpush1.msra.mxu0 0.0
        %471 = vmatprep.subr.mxu0 0.0
        %472 = vmatpush1.msra.mxu0 0.0
        %473 = vmatprep.subr.mxu0 0.0
        %474 = vmatpush1.msra.mxu0 0.0
        %475 = vmatprep.subr.mxu0 0.0
        %476 = vmatpush1.msra.mxu0 0.0
        %477 = vmatprep.subr.mxu0 0.0
        %478 = vmatpush1.msra.mxu0 0.0
        %479 = vmatprep.subr.mxu0 0.0
        %480 = vmatpush1.msra.mxu0 0.0
        %481 = vmatprep.subr.mxu0 0.0
        %482 = vmatpush1.msra.mxu0 0.0
        %483 = vmatprep.subr.mxu0 0.0
        %484 = vmatpush1.msra.mxu0 0.0
        %485 = vmatprep.subr.mxu0 0.0
        %486 = vmatpush1.msra.mxu0 0.0
        %487 = vmatprep.subr.mxu0 0.0
        %488 = vmatpush1.msra.mxu0 0.0
        %489 = vmatprep.subr.mxu0 0.0
        %490 = vmatpush1.msra.mxu0 0.0
        %491 = vmatprep.subr.mxu0 0.0
        %492 = vmatpush1.msra.mxu0 0.0
        %493 = vmatprep.subr.mxu0 0.0
        %494 = vmatpush1.msra.mxu0 0.0
        %495 = vmatprep.subr.mxu0 0.0
        %496 = vmatpush1.msra.mxu0 0.0
        %497 = vmatprep.subr.mxu0 0.0
        %498 = vmatpush1.msra.mxu0 0.0
        %499 = vmatprep.subr.mxu0 0.0
        %500 = vmatpush1.msra.mxu0 0.0
        %501 = vmatprep.subr.mxu0 0.0
        %502 = vmatpush1.msra.mxu0 0.0
        %503 = vmatprep.mubr.f32.mxu0 0.0
        %504 = vmatmul.mubr.f32.gmra.mrb[0].mxu0 %v366
        %v505 = vpop.f32.mrb[0].mxu0
        %v506 = vadd.f32 0.0, %v505
        %v507 = vpop.f32.mrb[0].mxu0
        %v508 = vadd.f32 0.0, %v507
        %509 = vdwg.mxu0
        %510 = vmatprep.subr.mxu0 %v321
        %511 = vmatpush1.msra.mxu0 %v320
        %512 = vmatprep.subr.mxu0 %v333
        %513 = vmatpush1.msra.mxu0 %v332
        %514 = vmatprep.subr.mxu0 %v345
        %515 = vmatpush1.msra.mxu0 %v344
        %516 = vmatprep.subr.mxu0 %v357
        %517 = vmatpush1.msra.mxu0 %v356
        %518 = vmatprep.subr.mxu0 0.0
        %519 = vmatpush1.msra.mxu0 0.0
        %520 = vmatprep.subr.mxu0 0.0
        %521 = vmatpush1.msra.mxu0 0.0
        %522 = vmatprep.subr.mxu0 0.0
        %523 = vmatpush1.msra.mxu0 0.0
        %524 = vmatprep.subr.mxu0 0.0
        %525 = vmatpush1.msra.mxu0 0.0
        %526 = vmatprep.subr.mxu0 0.0
        %527 = vmatpush1.msra.mxu0 0.0
        %528 = vmatprep.subr.mxu0 0.0
        %529 = vmatpush1.msra.mxu0 0.0
        %530 = vmatprep.subr.mxu0 0.0
        %531 = vmatpush1.msra.mxu0 0.0
        %532 = vmatprep.subr.mxu0 0.0
        %533 = vmatpush1.msra.mxu0 0.0
        %534 = vmatprep.subr.mxu0 0.0
        %535 = vmatpush1.msra.mxu0 0.0
        %536 = vmatprep.subr.mxu0 0.0
        %537 = vmatpush1.msra.mxu0 0.0
        %538 = vmatprep.subr.mxu0 0.0
        %539 = vmatpush1.msra.mxu0 0.0
        %540 = vmatprep.subr.mxu0 0.0
        %541 = vmatpush1.msra.mxu0 0.0
        %542 = vmatprep.subr.mxu0 0.0
        %543 = vmatpush1.msra.mxu0 0.0
        %544 = vmatprep.subr.mxu0 0.0
        %545 = vmatpush1.msra.mxu0 0.0
        %546 = vmatprep.subr.mxu0 0.0
        %547 = vmatpush1.msra.mxu0 0.0
        %548 = vmatprep.subr.mxu0 0.0
        %549 = vmatpush1.msra.mxu0 0.0
        %550 = vmatprep.subr.mxu0 0.0
        %551 = vmatpush1.msra.mxu0 0.0
        %552 = vmatprep.subr.mxu0 0.0
        %553 = vmatpush1.msra.mxu0 0.0
        %554 = vmatprep.subr.mxu0 0.0
        %555 = vmatpush1.msra.mxu0 0.0
        %556 = vmatprep.subr.mxu0 0.0
        %557 = vmatpush1.msra.mxu0 0.0
        %558 = vmatprep.subr.mxu0 0.0
        %559 = vmatpush1.msra.mxu0 0.0
        %560 = vmatprep.subr.mxu0 0.0
        %561 = vmatpush1.msra.mxu0 0.0
        %562 = vmatprep.subr.mxu0 0.0
        %563 = vmatpush1.msra.mxu0 0.0
        %564 = vmatprep.subr.mxu0 0.0
        %565 = vmatpush1.msra.mxu0 0.0
        %566 = vmatprep.subr.mxu0 0.0
        %567 = vmatpush1.msra.mxu0 0.0
        %568 = vmatprep.subr.mxu0 0.0
        %569 = vmatpush1.msra.mxu0 0.0
        %570 = vmatprep.subr.mxu0 0.0
        %571 = vmatpush1.msra.mxu0 0.0
        %572 = vmatprep.subr.mxu0 0.0
        %573 = vmatpush1.msra.mxu0 0.0
        %574 = vmatprep.mubr.f32.mxu0 0.0
        %575 = vmatmul.mubr.f32.gmra.mrb[0].mxu0 %v366
        %v576 = vpop.f32.mrb[0].mxu0
        %v577 = vadd.f32 0.0, %v576
        %v578 = vpop.f32.mrb[0].mxu0
        %v579 = vadd.f32 0.0, %v578
        %580 = vdwg.mxu0
        %581 = vmatprep.subr.mxu0 %v323
        %582 = vmatpush1.msra.mxu0 %v322
        %583 = vmatprep.subr.mxu0 %v335
        %584 = vmatpush1.msra.mxu0 %v334
        %585 = vmatprep.subr.mxu0 %v347
        %586 = vmatpush1.msra.mxu0 %v346
        %587 = vmatprep.subr.mxu0 %v359
        %588 = vmatpush1.msra.mxu0 %v358
        %589 = vmatprep.subr.mxu0 0.0
        %590 = vmatpush1.msra.mxu0 0.0
        %591 = vmatprep.subr.mxu0 0.0
        %592 = vmatpush1.msra.mxu0 0.0
        %593 = vmatprep.subr.mxu0 0.0
        %594 = vmatpush1.msra.mxu0 0.0
        %595 = vmatprep.subr.mxu0 0.0
        %596 = vmatpush1.msra.mxu0 0.0
        %597 = vmatprep.subr.mxu0 0.0
        %598 = vmatpush1.msra.mxu0 0.0
        %599 = vmatprep.subr.mxu0 0.0
        %600 = vmatpush1.msra.mxu0 0.0
        %601 = vmatprep.subr.mxu0 0.0
        %602 = vmatpush1.msra.mxu0 0.0
        %603 = vmatprep.subr.mxu0 0.0
        %604 = vmatpush1.msra.mxu0 0.0
        %605 = vmatprep.subr.mxu0 0.0
        %606 = vmatpush1.msra.mxu0 0.0
        %607 = vmatprep.subr.mxu0 0.0
        %608 = vmatpush1.msra.mxu0 0.0
        %609 = vmatprep.subr.mxu0 0.0
        %610 = vmatpush1.msra.mxu0 0.0
        %611 = vmatprep.subr.mxu0 0.0
        %612 = vmatpush1.msra.mxu0 0.0
        %613 = vmatprep.subr.mxu0 0.0
        %614 = vmatpush1.msra.mxu0 0.0
        %615 = vmatprep.subr.mxu0 0.0
        %616 = vmatpush1.msra.mxu0 0.0
        %617 = vmatprep.subr.mxu0 0.0
        %618 = vmatpush1.msra.mxu0 0.0
        %619 = vmatprep.subr.mxu0 0.0
        %620 = vmatpush1.msra.mxu0 0.0
        %621 = vmatprep.subr.mxu0 0.0
        %622 = vmatpush1.msra.mxu0 0.0
        %623 = vmatprep.subr.mxu0 0.0
        %624 = vmatpush1.msra.mxu0 0.0
        %625 = vmatprep.subr.mxu0 0.0
        %626 = vmatpush1.msra.mxu0 0.0
        %627 = vmatprep.subr.mxu0 0.0
        %628 = vmatpush1.msra.mxu0 0.0
        %629 = vmatprep.subr.mxu0 0.0
        %630 = vmatpush1.msra.mxu0 0.0
        %631 = vmatprep.subr.mxu0 0.0
        %632 = vmatpush1.msra.mxu0 0.0
        %633 = vmatprep.subr.mxu0 0.0
        %634 = vmatpush1.msra.mxu0 0.0
        %635 = vmatprep.subr.mxu0 0.0
        %636 = vmatpush1.msra.mxu0 0.0
        %637 = vmatprep.subr.mxu0 0.0
        %638 = vmatpush1.msra.mxu0 0.0
        %639 = vmatprep.subr.mxu0 0.0
        %640 = vmatpush1.msra.mxu0 0.0
        %641 = vmatprep.subr.mxu0 0.0
        %642 = vmatpush1.msra.mxu0 0.0
        %643 = vmatprep.subr.mxu0 0.0
        %644 = vmatpush1.msra.mxu0 0.0
        %645 = vmatprep.mubr.f32.mxu0 0.0
        %646 = vmatmul.mubr.f32.gmra.mrb[0].mxu0 %v366
        %v647 = vpop.f32.mrb[0].mxu0
        %v648 = vadd.f32 0.0, %v647
        %v649 = vpop.f32.mrb[0].mxu0
        %v650 = vadd.f32 0.0, %v649
        %651 = vdwg.mxu0
        %652 = vmatprep.subr.mxu0 %v325
        %653 = vmatpush1.msra.mxu0 %v324
        %654 = vmatprep.subr.mxu0 %v337
        %655 = vmatpush1.msra.mxu0 %v336
        %656 = vmatprep.subr.mxu0 %v349
        %657 = vmatpush1.msra.mxu0 %v348
        %658 = vmatprep.subr.mxu0 %v361
        %659 = vmatpush1.msra.mxu0 %v360
        %660 = vmatprep.subr.mxu0 0.0
        %661 = vmatpush1.msra.mxu0 0.0
        %662 = vmatprep.subr.mxu0 0.0
        %663 = vmatpush1.msra.mxu0 0.0
        %664 = vmatprep.subr.mxu0 0.0
        %665 = vmatpush1.msra.mxu0 0.0
        %666 = vmatprep.subr.mxu0 0.0
        %667 = vmatpush1.msra.mxu0 0.0
        %668 = vmatprep.subr.mxu0 0.0
        %669 = vmatpush1.msra.mxu0 0.0
        %670 = vmatprep.subr.mxu0 0.0
        %671 = vmatpush1.msra.mxu0 0.0
        %672 = vmatprep.subr.mxu0 0.0
        %673 = vmatpush1.msra.mxu0 0.0
        %674 = vmatprep.subr.mxu0 0.0
        %675 = vmatpush1.msra.mxu0 0.0
        %676 = vmatprep.subr.mxu0 0.0
        %677 = vmatpush1.msra.mxu0 0.0
        %678 = vmatprep.subr.mxu0 0.0
        %679 = vmatpush1.msra.mxu0 0.0
        %680 = vmatprep.subr.mxu0 0.0
        %681 = vmatpush1.msra.mxu0 0.0
        %682 = vmatprep.subr.mxu0 0.0
        %683 = vmatpush1.msra.mxu0 0.0
        %684 = vmatprep.subr.mxu0 0.0
        %685 = vmatpush1.msra.mxu0 0.0
        %686 = vmatprep.subr.mxu0 0.0
        %687 = vmatpush1.msra.mxu0 0.0
        %688 = vmatprep.subr.mxu0 0.0
        %689 = vmatpush1.msra.mxu0 0.0
        %690 = vmatprep.subr.mxu0 0.0
        %691 = vmatpush1.msra.mxu0 0.0
        %692 = vmatprep.subr.mxu0 0.0
        %693 = vmatpush1.msra.mxu0 0.0
        %694 = vmatprep.subr.mxu0 0.0
        %695 = vmatpush1.msra.mxu0 0.0
        %696 = vmatprep.subr.mxu0 0.0
        %697 = vmatpush1.msra.mxu0 0.0
        %698 = vmatprep.subr.mxu0 0.0
        %699 = vmatpush1.msra.mxu0 0.0
        %700 = vmatprep.subr.mxu0 0.0
        %701 = vmatpush1.msra.mxu0 0.0
        %702 = vmatprep.subr.mxu0 0.0
        %703 = vmatpush1.msra.mxu0 0.0
        %704 = vmatprep.subr.mxu0 0.0
        %705 = vmatpush1.msra.mxu0 0.0
        %706 = vmatprep.subr.mxu0 0.0
        %707 = vmatpush1.msra.mxu0 0.0
        %708 = vmatprep.subr.mxu0 0.0
        %709 = vmatpush1.msra.mxu0 0.0
        %710 = vmatprep.subr.mxu0 0.0
        %711 = vmatpush1.msra.mxu0 0.0
        %712 = vmatprep.subr.mxu0 0.0
        %713 = vmatpush1.msra.mxu0 0.0
        %714 = vmatprep.subr.mxu0 0.0
        %715 = vmatpush1.msra.mxu0 0.0
        %716 = vmatprep.mubr.f32.mxu0 0.0
        %717 = vmatmul.mubr.f32.gmra.mrb[0].mxu0 %v366
        %v718 = vpop.f32.mrb[0].mxu0
        %v719 = vadd.f32 0.0, %v718
        %v720 = vpop.f32.mrb[0].mxu0
        %v721 = vadd.f32 0.0, %v720
        %722 = vdwg.mxu0
        %723 = vmatprep.subr.mxu0 %v327
        %724 = vmatpush1.msra.mxu0 %v326
        %725 = vmatprep.subr.mxu0 %v339
        %726 = vmatpush1.msra.mxu0 %v338
        %727 = vmatprep.subr.mxu0 %v351
        %728 = vmatpush1.msra.mxu0 %v350
        %729 = vmatprep.subr.mxu0 %v363
        %730 = vmatpush1.msra.mxu0 %v362
        %731 = vmatprep.subr.mxu0 0.0
        %732 = vmatpush1.msra.mxu0 0.0
        %733 = vmatprep.subr.mxu0 0.0
        %734 = vmatpush1.msra.mxu0 0.0
        %735 = vmatprep.subr.mxu0 0.0
        %736 = vmatpush1.msra.mxu0 0.0
        %737 = vmatprep.subr.mxu0 0.0
        %738 = vmatpush1.msra.mxu0 0.0
        %739 = vmatprep.subr.mxu0 0.0
        %740 = vmatpush1.msra.mxu0 0.0
        %741 = vmatprep.subr.mxu0 0.0
        %742 = vmatpush1.msra.mxu0 0.0
        %743 = vmatprep.subr.mxu0 0.0
        %744 = vmatpush1.msra.mxu0 0.0
        %745 = vmatprep.subr.mxu0 0.0
        %746 = vmatpush1.msra.mxu0 0.0
        %747 = vmatprep.subr.mxu0 0.0
        %748 = vmatpush1.msra.mxu0 0.0
        %749 = vmatprep.subr.mxu0 0.0
        %750 = vmatpush1.msra.mxu0 0.0
        %751 = vmatprep.subr.mxu0 0.0
        %752 = vmatpush1.msra.mxu0 0.0
        %753 = vmatprep.subr.mxu0 0.0
        %754 = vmatpush1.msra.mxu0 0.0
        %755 = vmatprep.subr.mxu0 0.0
        %756 = vmatpush1.msra.mxu0 0.0
        %757 = vmatprep.subr.mxu0 0.0
        %758 = vmatpush1.msra.mxu0 0.0
        %759 = vmatprep.subr.mxu0 0.0
        %760 = vmatpush1.msra.mxu0 0.0
        %761 = vmatprep.subr.mxu0 0.0
        %762 = vmatpush1.msra.mxu0 0.0
        %763 = vmatprep.subr.mxu0 0.0
        %764 = vmatpush1.msra.mxu0 0.0
        %765 = vmatprep.subr.mxu0 0.0
        %766 = vmatpush1.msra.mxu0 0.0
        %767 = vmatprep.subr.mxu0 0.0
        %768 = vmatpush1.msra.mxu0 0.0
        %769 = vmatprep.subr.mxu0 0.0
        %770 = vmatpush1.msra.mxu0 0.0
        %771 = vmatprep.subr.mxu0 0.0
        %772 = vmatpush1.msra.mxu0 0.0
        %773 = vmatprep.subr.mxu0 0.0
        %774 = vmatpush1.msra.mxu0 0.0
        %775 = vmatprep.subr.mxu0 0.0
        %776 = vmatpush1.msra.mxu0 0.0
        %777 = vmatprep.subr.mxu0 0.0
        %778 = vmatpush1.msra.mxu0 0.0
        %779 = vmatprep.subr.mxu0 0.0
        %780 = vmatpush1.msra.mxu0 0.0
        %781 = vmatprep.subr.mxu0 0.0
        %782 = vmatpush1.msra.mxu0 0.0
        %783 = vmatprep.subr.mxu0 0.0
        %784 = vmatpush1.msra.mxu0 0.0
        %785 = vmatprep.subr.mxu0 0.0
        %786 = vmatpush1.msra.mxu0 0.0
        %787 = vmatprep.mubr.f32.mxu0 0.0
        %788 = vmatmul.mubr.f32.gmra.mrb[0].mxu0 %v366
        %v789 = vpop.f32.mrb[0].mxu0
        %v790 = vadd.f32 0.0, %v789
        %v791 = vpop.f32.mrb[0].mxu0
        %v792 = vadd.f32 0.0, %v791
        %793 = vdwg.mxu0
        %v794 = vadd.f32 %v303, %v435
        %v795 = vadd.f32 %v304, %v437
        %v796 = vadd.f32 %v305, %v506
        %v797 = vadd.f32 %v306, %v508
        %v798 = vadd.f32 %v307, %v577
        %v799 = vadd.f32 %v308, %v579
        %v800 = vadd.f32 %v309, %v648
        %v801 = vadd.f32 %v310, %v650
        %v802 = vadd.f32 %v311, %v719
        %v803 = vadd.f32 %v312, %v721
        %v804 = vadd.f32 %v313, %v790
        %v805 = vadd.f32 %v314, %v792
        %806 = vst [vmem:[#allocation2] sm:$0xff] %v794
        %807 = vst [vmem:[#allocation2 + $0x8] sm:$0xff] %v795
        %808 = vst [vmem:[#allocation2 + $0x10] sm:$0xff] %v796
        %809 = vst [vmem:[#allocation2 + $0x18] sm:$0xff] %v797
        %810 = vst [vmem:[#allocation2 + $0x20] sm:$0xff] %v798
        %811 = vst [vmem:[#allocation2 + $0x28] sm:$0xff] %v799
        %812 = vst [vmem:[#allocation2 + $0x30] sm:$0xff] %v800
        %813 = vst [vmem:[#allocation2 + $0x38] sm:$0xff] %v801
        %814 = vst [vmem:[#allocation2 + $0x40] sm:$0xff] %v802
        %815 = vst [vmem:[#allocation2 + $0x48] sm:$0xff] %v803
        %816 = vst [vmem:[#allocation2 + $0x50] sm:$0xff] %v804
        %817 = vst [vmem:[#allocation2 + $0x58] sm:$0xff] %v805
        // Predicated region
        $region41: #{tpu_custom_call.1} parent=27 // pred_check
          %p818 = pneg %p287
        $region42: #{tpu_custom_call.1} parent=27 // pred_check_branch
          %820 = sbr.rel (%p818) target = $region44
        $region43: #{tpu_custom_call.1} parent=27 // pred_region
          %v821 = vld [vmem:[#allocation2] sm:$0xff]
          %v822 = vld [vmem:[#allocation2 + $0x8] sm:$0xff]
          %v823 = vld [vmem:[#allocation2 + $0x10] sm:$0xff]
          %v824 = vld [vmem:[#allocation2 + $0x18] sm:$0xff]
          %v825 = vld [vmem:[#allocation2 + $0x20] sm:$0xff]
          %v826 = vld [vmem:[#allocation2 + $0x28] sm:$0xff]
          %v827 = vld [vmem:[#allocation2 + $0x30] sm:$0xff]
          %v828 = vld [vmem:[#allocation2 + $0x38] sm:$0xff]
          %v829 = vld [vmem:[#allocation2 + $0x40] sm:$0xff]
          %v830 = vld [vmem:[#allocation2 + $0x48] sm:$0xff]
          %v831 = vld [vmem:[#allocation2 + $0x50] sm:$0xff]
          %v832 = vld [vmem:[#allocation2 + $0x58] sm:$0xff]
          %833 = vst [vmem:[%s271] sm:$0xff] %v821
          %834 = vst [vmem:[%s271 + $0x8] sm:$0xff] %v822
          %835 = vst [vmem:[%s271 + $0x10] sm:$0xff] %v823
          %836 = vst [vmem:[%s271 + $0x18] sm:$0xff] %v824
          %837 = vst [vmem:[%s278] sm:$0xff] %v825
          %838 = vst [vmem:[%s278 + $0x8] sm:$0xff] %v826
          %839 = vst [vmem:[%s278 + $0x10] sm:$0xff] %v827
          %840 = vst [vmem:[%s278 + $0x18] sm:$0xff] %v828
          %841 = vst [vmem:[%s285] sm:$0xff] %v829
          %842 = vst [vmem:[%s285 + $0x8] sm:$0xff] %v830
          %843 = vst [vmem:[%s285 + $0x10] sm:$0xff] %v831
          %844 = vst [vmem:[%s285 + $0x18] sm:$0xff] %v832
        $region44: #{tpu_custom_call.1} parent=27 // pred_fallthru
          _
        %s845 = sand.u32 %s111, 1
        %s846 = scalar_lea.sflag [#allocation5], %s845
        %s847 = sand.u32 %s111, 1
        %s848 = smul.addr %s847, 32
        %s849 = scalar_lea.vmem [#allocation8], %s848
        %s850 = sand.u32 %s26, 1
        %s851 = scalar_lea.sflag [#allocation10], %s850
        %s852 = sand.u32 %s139, 1
        %s853 = smul.addr %s852, 32
        %s854 = scalar_lea.vmem [#allocation9], %s853
        %s855 = sand.u32 %s26, 1
        %s856 = scalar_lea.sflag [#allocation10], %s855
        %s857 = sand.u32 %s167, 1
        %s858 = smul.addr %s857, 32
        %s859 = scalar_lea.vmem [#allocation11], %s858
        // Predicated region
        $region45: #{tpu_custom_call.1} parent=27 // pred_check
          %p860 = pneg %p121
        $region46: #{tpu_custom_call.1} parent=27 // pred_check_branch
          %862 = sbr.rel (%p860) target = $region48
        $region47: #{tpu_custom_call.1} parent=27 // pred_region
          %s864 = ssub.s32 512, 512
          %865 = vsyncadd %s846, %s864
          %s866 = smul.addr %s32, 4
          %s867 = smul.addr %s31, 4
          %s868 = sadd.s32 %s866, %s867
          %s869 = smul.addr %s868, 128
          %s870 = scalar_lea.hbm %s2, %s869
          %s872 = sshll.u32 %s849, 4
          %s873 = int_to_ptr.vmem [resolvable:$true] %s872
          %875 = dma.vmem_to_hbm [thread:$0]  %s873, 512, %s870, %s846
        $region48: #{tpu_custom_call.1} parent=27 // pred_fallthru
          _
        // Predicated region
        $region49: #{tpu_custom_call.1} parent=27 // pred_check
          %p876 = pneg %p149
        $region50: #{tpu_custom_call.1} parent=27 // pred_check_branch
          %878 = sbr.rel (%p876) target = $region52
        $region51: #{tpu_custom_call.1} parent=27 // pred_region
          %s880 = ssub.s32 512, 512
          %881 = vsyncadd %s851, %s880
          %s882 = smul.addr %s32, 4
          %s883 = smul.addr %s31, 4
          %s884 = sadd.s32 %s882, %s883
          %s885 = smul.addr %s884, 128
          %s886 = scalar_lea.hbm %s3, %s885
          %s888 = sshll.u32 %s854, 4
          %s889 = int_to_ptr.vmem [resolvable:$true] %s888
          %891 = dma.vmem_to_hbm [thread:$0]  %s889, 512, %s886, %s851
        $region52: #{tpu_custom_call.1} parent=27 // pred_fallthru
          _
        // Predicated region
        $region53: #{tpu_custom_call.1} parent=27 // pred_check
          %p892 = pneg %p177
        $region54: #{tpu_custom_call.1} parent=27 // pred_check_branch
          %894 = sbr.rel (%p892) target = $region56
        $region55: #{tpu_custom_call.1} parent=27 // pred_region
          %s896 = ssub.s32 512, 512
          %897 = vsyncadd %s856, %s896
          %s898 = smul.addr %s32, 4
          %s899 = smul.addr %s31, 4
          %s900 = sadd.s32 %s898, %s899
          %s901 = smul.addr %s900, 128
          %s902 = scalar_lea.hbm %s4, %s901
          %s904 = sshll.u32 %s859, 4
          %s905 = int_to_ptr.vmem [resolvable:$true] %s904
          %907 = dma.vmem_to_hbm [thread:$0]  %s905, 512, %s902, %s856
        $region56: #{tpu_custom_call.1} parent=27 // pred_fallthru
          _
      $region28: #{tpu_custom_call.1} parent=5 // pred_fallthru
        _
      %p908 = scmp.le.s32.totalorder 2, %s21
      // Predicated region
      $region57: #{tpu_custom_call.1} parent=5 // pred_check
        %p909 = pneg %p908
      $region58: #{tpu_custom_call.1} parent=5 // pred_check_branch
        %911 = sbr.rel (%p909) target = $region60
      $region59: #{tpu_custom_call.1} parent=5 // pred_region
        %s912 = ssub.s32 %s21, 2
        // Predicated region
        $region61: #{tpu_custom_call.1} parent=59 // pred_check
          %p913 = pneg %p127
        $region62: #{tpu_custom_call.1} parent=59 // pred_check_branch
          %915 = sbr.rel (%p913) target = $region64
        $region63: #{tpu_custom_call.1} parent=59 // pred_region
          %s916 = sand.u32 %s112, 1
          %s917 = scalar_lea.sflag [#allocation5], %s916
          %s918 = sand.u32 %s112, 1
          %s919 = smul.addr %s918, 32
          %s920 = scalar_lea.vmem [#allocation8], %s919
          %921 = dma.done %s917, 512
        $region64: #{tpu_custom_call.1} parent=59 // pred_fallthru
          _
        // Predicated region
        $region65: #{tpu_custom_call.1} parent=59 // pred_check
          %p922 = pneg %p155
        $region66: #{tpu_custom_call.1} parent=59 // pred_check_branch
          %924 = sbr.rel (%p922) target = $region68
        $region67: #{tpu_custom_call.1} parent=59 // pred_region
          %s925 = sand.u32 %s27, 1
          %s926 = scalar_lea.sflag [#allocation10], %s925
          %s927 = sand.u32 %s140, 1
          %s928 = smul.addr %s927, 32
          %s929 = scalar_lea.vmem [#allocation9], %s928
          %930 = dma.done %s926, 512
        $region68: #{tpu_custom_call.1} parent=59 // pred_fallthru
          _
        // Predicated region
        $region69: #{tpu_custom_call.1} parent=59 // pred_check
          %p931 = pneg %p183
        $region70: #{tpu_custom_call.1} parent=59 // pred_check_branch
          %933 = sbr.rel (%p931) target = $region72
        $region71: #{tpu_custom_call.1} parent=59 // pred_region
          %s934 = sand.u32 %s27, 1
          %s935 = scalar_lea.sflag [#allocation10], %s934
          %s936 = sand.u32 %s168, 1
          %s937 = smul.addr %s936, 32
          %s938 = scalar_lea.vmem [#allocation11], %s937
          %939 = dma.done %s935, 512
        $region72: #{tpu_custom_call.1} parent=59 // pred_fallthru
          _
      $region60: #{tpu_custom_call.1} parent=5 // pred_fallthru
        _
    $region6: #{tpu_custom_call.1} parent=1 // loop_footer
      %s25 = sadd.s32 1, %s21
    $region7: #{tpu_custom_call.1} parent=1 // loop_footer_branch
      %20 = sbr.rel target = $region3
    $region8: #{tpu_custom_call.1} parent=1 // loop_exit
      _
    %940 = vsyncpa [#allocation4], 1
    %s941 = scalar_lea.sflag [#allocation4], 1
    %942 = vsyncpa %s941, 1
    %943 = vsyncpa [#allocation7], 1
    %944 = vsyncpa [#allocation5], 1
    %s945 = scalar_lea.sflag [#allocation5], 1
    %946 = vsyncpa %s945, 1
    %947 = vsyncpa [#allocation10], 1
    %s948 = scalar_lea.sflag [#allocation10], 1
    %949 = vsyncpa %s948, 1

</llo_original>
